<compile_context>
chip_gen: v7x
topology: tpu7x:2x2x1
jax: 0.10.0
libtpu: 0.0.40
codegen_flags: <defaults>
</compile_context>

<pallas_src>
import jax
import jax.numpy as jnp
from jax.experimental import pallas as pl
from jax.experimental.pallas import tpu as pltpu

VOCAB = 26
EMBED_DIM = 16
_LANE = 128
_R_TILE_DEFAULT = 1024  # 1024 rows x 8 indices/row = 8192 indices per grid step


def _embed_kernel(idx_ref, table_ref, out_ref):
    # idx_ref:   (R, SLOTS) int32, each value already offset by slot*VOCAB
    # table_ref: (SLOTS*VOCAB, SLOTS*EMBED) f32 block-diagonal replicated table
    # out_ref:   (R, SLOTS*EMBED) f32 lane-dense output slab (128 lanes wide)
    r = idx_ref.shape[0]
    slots = idx_ref.shape[1]
    c = table_ref.shape[0]

    col = jax.lax.broadcasted_iota(jnp.int32, (r, c), 1)          # (R, 208)
    onehot = jnp.zeros((r, c), jnp.float32)
    # Static 8-way loop: each slot contributes exactly one 1.0 per row.
    for s in range(slots):
        onehot = onehot + (idx_ref[:, s:s + 1] == col).astype(jnp.float32)

    out_ref[...] = jnp.dot(onehot, table_ref[...],
                           preferred_element_type=jnp.float32)    # (R, 128)


def _make_blockdiag_table(embed_table, slots):
    """(V, D) -> (slots*V, slots*D) block-diagonal with the table on the diagonal."""
    v, d = embed_table.shape
    eye = jnp.eye(slots, dtype=embed_table.dtype)                 # (S, S)
    bd = jnp.einsum('st,vd->svtd', eye, embed_table)              # (S, V, S, D)
    return bd.reshape(slots * v, slots * d)                       # (208, 128)


def letter_encoder_forward(letter_idx, embed_table, *, r_tile=_R_TILE_DEFAULT):
    """JAX/Pallas equivalent of LetterEncoder.forward.

    letter_idx:  integer array of any shape, values in [0, 26)
    embed_table: (26, letter_embed_dim) float32 embedding weights
    returns:     letter_idx.shape + (letter_embed_dim,) float32
    """
    orig_shape = letter_idx.shape
    v, d = embed_table.shape
    assert _LANE % d == 0, "embed dim must divide 128 for lane-dense packing"
    slots = _LANE // d                                             # 8 for D=16

    # Clip so out-of-range indices cannot alias a neighbouring slot's block.
    idx_flat = jnp.clip(letter_idx.reshape(-1).astype(jnp.int32), 0, v - 1)
    n = idx_flat.shape[0]

    # Pack 8 indices per output row; pad rows up to a multiple of the row tile.
    r_total = max(pl.cdiv(n, slots), 1)
    r_tile = max(min(r_tile, r_total), 1)
    r_padded = pl.cdiv(r_total, r_tile) * r_tile
    n_pad = r_padded * slots

    idx_pad = jnp.pad(idx_flat, (0, n_pad - n))                    # zero pad
    idx_grp = idx_pad.reshape(r_padded, slots)                     # (R, 8)
    offsets = (jnp.arange(slots, dtype=jnp.int32) * v)[None, :]    # (1, 8)
    idx_off = idx_grp + offsets                                    # (R, 8)

    table_bd = _make_blockdiag_table(embed_table.astype(jnp.float32), slots)

    grid = (r_padded // r_tile,)
    cost = pl.CostEstimate(
        flops=2 * r_padded * (slots * v) * (slots * d),
        transcendentals=0,
        bytes_accessed=(idx_off.size * 4                 # index read
                        + r_padded * slots * d * 4       # output write
                        + table_bd.size * 4),            # table read (resident)
    )

    out = pl.pallas_call(
        _embed_kernel,
        out_shape=jax.ShapeDtypeStruct((r_padded, slots * d), jnp.float32),
        grid=grid,
        in_specs=[
            pl.BlockSpec((r_tile, slots), lambda i: (i, 0)),          # tiled idx
            pl.BlockSpec((slots * v, slots * d), lambda i: (0, 0)),   # resident table
        ],
        out_specs=pl.BlockSpec((r_tile, slots * d), lambda i: (i, 0)),
        compiler_params=pltpu.CompilerParams(
            dimension_semantics=("parallel",)),
        cost_estimate=cost,
    )(idx_off, table_bd)

    emb = out.reshape(n_pad, d)[:n]                                # free: row-major
    return emb.reshape(*orig_shape, d)


if __name__ == "__main__":
    key = jax.random.PRNGKey(0)
    k_idx, k_w, k_idx2 = jax.random.split(key, 3)

    # Deterministic "parameters": nn.Embedding(26, 16) default init ~ N(0, 1).
    embed_table = jax.random.normal(k_w, (VOCAB, EMBED_DIM), dtype=jnp.float32)

    # Small example consistent with the module: batch=2, seq=8 letter indices.
    letter_idx = jax.random.randint(k_idx, (2, 8), minval=0, maxval=VOCAB,
                                    dtype=jnp.int32)
    out = letter_encoder_forward(letter_idx, embed_table)
    out = jax.block_until_ready(out)
    ref = jnp.take(embed_table, letter_idx, axis=0)
    assert out.shape == (2, 8, EMBED_DIM)
    assert jnp.allclose(out, ref, atol=1e-6), "mismatch vs reference gather (small)"

    # Second check: multi-step grid + ragged tail (small r_tile to force tiling).
    letter_idx2 = jax.random.randint(k_idx2, (3, 700), minval=0, maxval=VOCAB,
                                     dtype=jnp.int32)
    out2 = letter_encoder_forward(letter_idx2, embed_table, r_tile=64)
    out2 = jax.block_until_ready(out2)
    ref2 = jnp.take(embed_table, letter_idx2, axis=0)
    assert out2.shape == (3, 700, EMBED_DIM)
    assert jnp.allclose(out2, ref2, atol=1e-6), "mismatch vs reference gather (tiled)"

    print("KERNEL_OK")
</pallas_src>

<mosaic_0001>
module attributes {stable_mosaic.version = 11 : i64} {
  func.func @_embed_kernel(%arg0: i32, %arg1: memref<2x8xi32, #tpu.memory_space<vmem>>, %arg2: memref<208x128xf32, #tpu.memory_space<vmem>>, %arg3: memref<2x128xf32, #tpu.memory_space<vmem>>) attributes {dimension_semantics = [#tpu.dimension_semantics<parallel>], iteration_bounds = array<i64: 1>, scalar_prefetch = 0 : i64, scratch_operands = 0 : i64, tpu.core_type = #tpu.core_type<tc>, window_params = [{transform_indices = @transform_0, window_bounds = array<i64: 2, 8>}, {pipeline_mode = #tpu.pipeline_mode<synchronous>, transform_indices = @transform_1, window_bounds = array<i64: 208, 128>}, {transform_indices = @transform_2, window_bounds = array<i64: 2, 128>}]} {
    %0 = tpu.iota {dimensions = array<i32: 1>} : vector<2x208xi32>
    %cst = arith.constant 0.000000e+00 : f32
    %1 = vector.broadcast %cst : f32 to vector<2x208xf32>
    %c0 = arith.constant 0 : index
    %c0_0 = arith.constant 0 : index
    %2 = vector.load %arg1[%c0, %c0_0] : memref<2x8xi32, #tpu.memory_space<vmem>>, vector<2x1xi32>
    %3 = vector.broadcast %2 : vector<2x1xi32> to vector<2x208xi32>
    %4 = arith.cmpi eq, %3, %0 : vector<2x208xi32>
    %5 = arith.extui %4 : vector<2x208xi1> to vector<2x208xi32>
    %6 = arith.sitofp %5 : vector<2x208xi32> to vector<2x208xf32>
    %7 = arith.addf %1, %6 : vector<2x208xf32>
    %c0_1 = arith.constant 0 : index
    %c1 = arith.constant 1 : index
    %8 = vector.load %arg1[%c0_1, %c1] : memref<2x8xi32, #tpu.memory_space<vmem>>, vector<2x1xi32>
    %9 = vector.broadcast %8 : vector<2x1xi32> to vector<2x208xi32>
    %10 = arith.cmpi eq, %9, %0 : vector<2x208xi32>
    %11 = arith.extui %10 : vector<2x208xi1> to vector<2x208xi32>
    %12 = arith.sitofp %11 : vector<2x208xi32> to vector<2x208xf32>
    %13 = arith.addf %7, %12 : vector<2x208xf32>
    %c0_2 = arith.constant 0 : index
    %c2 = arith.constant 2 : index
    %14 = vector.load %arg1[%c0_2, %c2] : memref<2x8xi32, #tpu.memory_space<vmem>>, vector<2x1xi32>
    %15 = vector.broadcast %14 : vector<2x1xi32> to vector<2x208xi32>
    %16 = arith.cmpi eq, %15, %0 : vector<2x208xi32>
    %17 = arith.extui %16 : vector<2x208xi1> to vector<2x208xi32>
    %18 = arith.sitofp %17 : vector<2x208xi32> to vector<2x208xf32>
    %19 = arith.addf %13, %18 : vector<2x208xf32>
    %c0_3 = arith.constant 0 : index
    %c3 = arith.constant 3 : index
    %20 = vector.load %arg1[%c0_3, %c3] : memref<2x8xi32, #tpu.memory_space<vmem>>, vector<2x1xi32>
    %21 = vector.broadcast %20 : vector<2x1xi32> to vector<2x208xi32>
    %22 = arith.cmpi eq, %21, %0 : vector<2x208xi32>
    %23 = arith.extui %22 : vector<2x208xi1> to vector<2x208xi32>
    %24 = arith.sitofp %23 : vector<2x208xi32> to vector<2x208xf32>
    %25 = arith.addf %19, %24 : vector<2x208xf32>
    %c0_4 = arith.constant 0 : index
    %c4 = arith.constant 4 : index
    %26 = vector.load %arg1[%c0_4, %c4] : memref<2x8xi32, #tpu.memory_space<vmem>>, vector<2x1xi32>
    %27 = vector.broadcast %26 : vector<2x1xi32> to vector<2x208xi32>
    %28 = arith.cmpi eq, %27, %0 : vector<2x208xi32>
    %29 = arith.extui %28 : vector<2x208xi1> to vector<2x208xi32>
    %30 = arith.sitofp %29 : vector<2x208xi32> to vector<2x208xf32>
    %31 = arith.addf %25, %30 : vector<2x208xf32>
    %c0_5 = arith.constant 0 : index
    %c5 = arith.constant 5 : index
    %32 = vector.load %arg1[%c0_5, %c5] : memref<2x8xi32, #tpu.memory_space<vmem>>, vector<2x1xi32>
    %33 = vector.broadcast %32 : vector<2x1xi32> to vector<2x208xi32>
    %34 = arith.cmpi eq, %33, %0 : vector<2x208xi32>
    %35 = arith.extui %34 : vector<2x208xi1> to vector<2x208xi32>
    %36 = arith.sitofp %35 : vector<2x208xi32> to vector<2x208xf32>
    %37 = arith.addf %31, %36 : vector<2x208xf32>
    %c0_6 = arith.constant 0 : index
    %c6 = arith.constant 6 : index
    %38 = vector.load %arg1[%c0_6, %c6] : memref<2x8xi32, #tpu.memory_space<vmem>>, vector<2x1xi32>
    %39 = vector.broadcast %38 : vector<2x1xi32> to vector<2x208xi32>
    %40 = arith.cmpi eq, %39, %0 : vector<2x208xi32>
    %41 = arith.extui %40 : vector<2x208xi1> to vector<2x208xi32>
    %42 = arith.sitofp %41 : vector<2x208xi32> to vector<2x208xf32>
    %43 = arith.addf %37, %42 : vector<2x208xf32>
    %c0_7 = arith.constant 0 : index
    %c7 = arith.constant 7 : index
    %44 = vector.load %arg1[%c0_7, %c7] : memref<2x8xi32, #tpu.memory_space<vmem>>, vector<2x1xi32>
    %45 = vector.broadcast %44 : vector<2x1xi32> to vector<2x208xi32>
    %46 = arith.cmpi eq, %45, %0 : vector<2x208xi32>
    %47 = arith.extui %46 : vector<2x208xi1> to vector<2x208xi32>
    %48 = arith.sitofp %47 : vector<2x208xi32> to vector<2x208xf32>
    %49 = arith.addf %43, %48 : vector<2x208xf32>
    %c0_8 = arith.constant 0 : index
    %c0_9 = arith.constant 0 : index
    %50 = vector.load %arg2[%c0_8, %c0_9] : memref<208x128xf32, #tpu.memory_space<vmem>>, vector<208x128xf32>
    %cst_10 = arith.constant dense<0.000000e+00> : vector<2x128xf32>
    %51 = tpu.matmul %49, %50, %cst_10 {dimension_numbers = #tpu.dot_dimension_numbers<[1], [0], [0], [1], [0, 0, 1, 1], [], []>} : vector<2x208xf32>, vector<208x128xf32>, vector<2x128xf32> -> vector<2x128xf32>
    %c0_11 = arith.constant 0 : index
    %c0_12 = arith.constant 0 : index
    %52 = vector.load %arg3[%c0_11, %c0_12] : memref<2x128xf32, #tpu.memory_space<vmem>>, vector<2x128xf32>
    tpu.vector_store %arg3[%c0_11, %c0_12], %51 {strides = array<i32>} : memref<2x128xf32, #tpu.memory_space<vmem>>, vector<2x128xf32>,
    return
  }
  func.func @transform_0(%arg0: i32) -> (i32, i32) {
    %c0_i32 = arith.constant 0 : i32
    %c0_i32_0 = arith.constant 0 : i32
    return %arg0, %c0_i32 : i32, i32
  }
  func.func @transform_1(%arg0: i32) -> (i32, i32) {
    %c0_i32 = arith.constant 0 : i32
    %c0_i32_0 = arith.constant 0 : i32
    %c0_i32_1 = arith.constant 0 : i32
    return %c0_i32, %c0_i32_0 : i32, i32
  }
  func.func @transform_2(%arg0: i32) -> (i32, i32) {
    %c0_i32 = arith.constant 0 : i32
    %c0_i32_0 = arith.constant 0 : i32
    return %arg0, %c0_i32 : i32, i32
  }
}

</mosaic_0001>

<llo_original>
// kernel: tpu_custom_call.1
$region0: #{tpu_custom_call.1}
  #allocation0 [shape = 'u32[]', space=smem, size = 0x4, offset = 0x4, fixed_abs, tag = 'smem constant byte address 0x4 - core index']
  #allocation1 [shape = 'u32[144,128]{1,0:T(1,128)}', space=vmem, size = 0x12000, scoped, tag = 'internal scratch']
  %s0 = inlined_call_operand.hbm [shape: s32[2,8], index: 0, kind: input, shape index: {}]
  %s1 = inlined_call_operand.hbm [shape: f32[208,128], index: 1, kind: input, shape index: {}]
  %s2 = inlined_call_operand.hbm [shape: f32[2,128], index: 2, kind: output, shape index: {}]
  %s3 = sld [smem:[#allocation0]]
  $region26: #{tpu_custom_call.1} parent=0
    _
  %s5 = ssub.s32 1, %s3
  %s6 = scalar_select 0, %s5, %s3
  $region1: #{tpu_custom_call.1} parent=0
    #allocation2 [shape = 'u8[1024]{0}', space=vmem, size = 0x400, scoped, tag = 'input window, operand 0, single buffered']
    #allocation3 [shape = 's32[1]{0}', space=sflag, size = 0x4, scoped, tag = 'scoped memory for tpu_custom_call.1']
    #allocation4 [shape = 's32[1]{0}', space=sflag, size = 0x4, scoped, tag = 'scoped memory for tpu_custom_call.1']
    #allocation5 [shape = 'u8[106496]{0}', space=vmem, size = 0x1a000, scoped, tag = 'input window, operand 1, single buffered']
    #allocation6 [shape = 's32[1]{0}', space=sflag, size = 0x4, scoped, tag = 'scoped memory for tpu_custom_call.1']
    #allocation7 [shape = 'u8[1024]{0}', space=vmem, size = 0x400, scoped, tag = 'output window, operand 0, single buffered']
    %7 = vsyncpa [#allocation3], 0
    %8 = vsyncpa [#allocation6], 0
    %9 = vsyncpa [#allocation4], 0
    // Predicated region
    $region2: #{tpu_custom_call.1} parent=1 // pred_check
      _
    $region3: #{tpu_custom_call.1} parent=1 // pred_check_branch
      %11 = sbr.rel (0) target = $region5
    $region4: #{tpu_custom_call.1} parent=1 // pred_region
      %s13 = ssub.s32 32, 32
      %14 = vsyncadd [#allocation3], %s13
      %s16 = sshll.u32 [#allocation2], 4
      %s17 = int_to_ptr.vmem [resolvable:$true] %s16
      %19 = dma.hbm_to_vmem [thread:$0]  %s0, 32, %s17, [#allocation3]
    $region5: #{tpu_custom_call.1} parent=1 // pred_fallthru
      _
    // Predicated region
    $region6: #{tpu_custom_call.1} parent=1 // pred_check
      _
    $region7: #{tpu_custom_call.1} parent=1 // pred_check_branch
      %21 = sbr.rel (0) target = $region9
    $region8: #{tpu_custom_call.1} parent=1 // pred_region
      %s23 = ssub.s32 3328, 3328
      %24 = vsyncadd [#allocation6], %s23
      %s25 = sshll.u32 [#allocation5], 4
      %s26 = int_to_ptr.vmem [resolvable:$true] %s25
      %31 = dma.hbm_to_vmem [thread:$0]  %s1, 3328, %s26, [#allocation6], 128, 128, 8
    $region9: #{tpu_custom_call.1} parent=1 // pred_fallthru
      _
    // Predicated region
    $region10: #{tpu_custom_call.1} parent=1 // pred_check
      _
    $region11: #{tpu_custom_call.1} parent=1 // pred_check_branch
      %33 = sbr.rel (0) target = $region13
    $region12: #{tpu_custom_call.1} parent=1 // pred_region
      %34 = dma.done [#allocation3], 32
    $region13: #{tpu_custom_call.1} parent=1 // pred_fallthru
      _
    // Predicated region
    $region14: #{tpu_custom_call.1} parent=1 // pred_check
      _
    $region15: #{tpu_custom_call.1} parent=1 // pred_check_branch
      %36 = sbr.rel (0) target = $region17
    $region16: #{tpu_custom_call.1} parent=1 // pred_region
      %37 = dma.done [#allocation6], 3328
    $region17: #{tpu_custom_call.1} parent=1 // pred_fallthru
      _
    %v38 = vlaneseq
    %v39 = vand.u32 %v38, 127
    %v40 = vadd.s32 %v39, 128
    %v41 = vld [vmem:[#allocation2] sm:$0x3]
    %42 = vset.pattern.permute.xlu0 0
    %43 = vperm.xlu0 %42, %v41
    %v44 = vpop.permute.xlu0 %43
    %vm45 = vcmp.eq.s32.totalorder %v44, %v39
    %vm46 = vcmp.eq.s32.totalorder %v44, %v40
    %v47 = vsel %vm45, 1, 0
    %v48 = vsel %vm46, 1, 0
    %v49 = vcvt.s32.f32 %v47
    %v50 = vcvt.s32.f32 %v48
    %v51 = vadd.f32 %v49, 0.0
    %v52 = vadd.f32 %v50, 0.0
    %53 = vset.pattern.permute.xlu0 1
    %54 = vperm.xlu0 %53, %v41
    %v55 = vpop.permute.xlu0 %54
    %vm56 = vcmp.eq.s32.totalorder %v55, %v39
    %vm57 = vcmp.eq.s32.totalorder %v55, %v40
    %v58 = vsel %vm56, 1, 0
    %v59 = vsel %vm57, 1, 0
    %v60 = vcvt.s32.f32 %v58
    %v61 = vcvt.s32.f32 %v59
    %v62 = vadd.f32 %v51, %v60
    %v63 = vadd.f32 %v52, %v61
    %64 = vset.pattern.permute.xlu0 2
    %65 = vperm.xlu0 %64, %v41
    %v66 = vpop.permute.xlu0 %65
    %vm67 = vcmp.eq.s32.totalorder %v66, %v39
    %vm68 = vcmp.eq.s32.totalorder %v66, %v40
    %v69 = vsel %vm67, 1, 0
    %v70 = vsel %vm68, 1, 0
    %v71 = vcvt.s32.f32 %v69
    %v72 = vcvt.s32.f32 %v70
    %v73 = vadd.f32 %v62, %v71
    %v74 = vadd.f32 %v63, %v72
    %75 = vset.pattern.permute.xlu0 3
    %76 = vperm.xlu0 %75, %v41
    %v77 = vpop.permute.xlu0 %76
    %vm78 = vcmp.eq.s32.totalorder %v77, %v39
    %vm79 = vcmp.eq.s32.totalorder %v77, %v40
    %v80 = vsel %vm78, 1, 0
    %v81 = vsel %vm79, 1, 0
    %v82 = vcvt.s32.f32 %v80
    %v83 = vcvt.s32.f32 %v81
    %v84 = vadd.f32 %v73, %v82
    %v85 = vadd.f32 %v74, %v83
    %86 = vset.pattern.permute.xlu0 4
    %87 = vperm.xlu0 %86, %v41
    %v88 = vpop.permute.xlu0 %87
    %vm89 = vcmp.eq.s32.totalorder %v88, %v39
    %vm90 = vcmp.eq.s32.totalorder %v88, %v40
    %v91 = vsel %vm89, 1, 0
    %v92 = vsel %vm90, 1, 0
    %v93 = vcvt.s32.f32 %v91
    %v94 = vcvt.s32.f32 %v92
    %v95 = vadd.f32 %v84, %v93
    %v96 = vadd.f32 %v85, %v94
    %97 = vset.pattern.permute.xlu0 5
    %98 = vperm.xlu0 %97, %v41
    %v99 = vpop.permute.xlu0 %98
    %vm100 = vcmp.eq.s32.totalorder %v99, %v39
    %vm101 = vcmp.eq.s32.totalorder %v99, %v40
    %v102 = vsel %vm100, 1, 0
    %v103 = vsel %vm101, 1, 0
    %v104 = vcvt.s32.f32 %v102
    %v105 = vcvt.s32.f32 %v103
    %v106 = vadd.f32 %v95, %v104
    %v107 = vadd.f32 %v96, %v105
    %108 = vset.pattern.permute.xlu0 6
    %109 = vperm.xlu0 %108, %v41
    %v110 = vpop.permute.xlu0 %109
    %vm111 = vcmp.eq.s32.totalorder %v110, %v39
    %vm112 = vcmp.eq.s32.totalorder %v110, %v40
    %v113 = vsel %vm111, 1, 0
    %v114 = vsel %vm112, 1, 0
    %v115 = vcvt.s32.f32 %v113
    %v116 = vcvt.s32.f32 %v114
    %v117 = vadd.f32 %v106, %v115
    %v118 = vadd.f32 %v107, %v116
    %119 = vset.pattern.permute.xlu0 7
    %120 = vperm.xlu0 %119, %v41
    %v121 = vpop.permute.xlu0 %120
    %vm122 = vcmp.eq.s32.totalorder %v121, %v39
    %vm123 = vcmp.eq.s32.totalorder %v121, %v40
    %v124 = vsel %vm122, 1, 0
    %v125 = vsel %vm123, 1, 0
    %v126 = vcvt.s32.f32 %v124
    %v127 = vcvt.s32.f32 %v125
    %v128 = vadd.f32 %v117, %v126
    %v129 = vadd.f32 %v118, %v127
    %v130 = vld [vmem:[#allocation5] sm:$0xff]
    %v131 = vld [vmem:[#allocation5 + $0x8] sm:$0xff]
    %v132 = vld [vmem:[#allocation5 + $0x10] sm:$0xff]
    %v133 = vld [vmem:[#allocation5 + $0x18] sm:$0xff]
    %v134 = vld [vmem:[#allocation5 + $0x20] sm:$0xff]
    %v135 = vld [vmem:[#allocation5 + $0x28] sm:$0xff]
    %v136 = vld [vmem:[#allocation5 + $0x30] sm:$0xff]
    %v137 = vld [vmem:[#allocation5 + $0x38] sm:$0xff]
    %v138 = vld [vmem:[#allocation5 + $0x40] sm:$0xff]
    %v139 = vld [vmem:[#allocation5 + $0x48] sm:$0xff]
    %v140 = vld [vmem:[#allocation5 + $0x50] sm:$0xff]
    %v141 = vld [vmem:[#allocation5 + $0x58] sm:$0xff]
    %v142 = vld [vmem:[#allocation5 + $0x60] sm:$0xff]
    %v143 = vld [vmem:[#allocation5 + $0x68] sm:$0xff]
    %v144 = vld [vmem:[#allocation5 + $0x70] sm:$0xff]
    %v145 = vld [vmem:[#allocation5 + $0x78] sm:$0xff]
    %v146 = vld [vmem:[#allocation5 + $0x80] sm:$0xff]
    %v147 = vld [vmem:[#allocation5 + $0x88] sm:$0xff]
    %v148 = vld [vmem:[#allocation5 + $0x90] sm:$0xff]
    %v149 = vld [vmem:[#allocation5 + $0x98] sm:$0xff]
    %v150 = vld [vmem:[#allocation5 + $0xa0] sm:$0xff]
    %v151 = vld [vmem:[#allocation5 + $0xa8] sm:$0xff]
    %v152 = vld [vmem:[#allocation5 + $0xb0] sm:$0xff]
    %v153 = vld [vmem:[#allocation5 + $0xb8] sm:$0xff]
    %v154 = vld [vmem:[#allocation5 + $0xc0] sm:$0xff]
    %v155 = vld [vmem:[#allocation5 + $0xc8] sm:$0xff]
    %vm156 = vcmask 654336
    %v158 = vsel %vm156, %v129, 0
    %160 = vmatprep.subr.mxu0 0.0
    %161 = vmatpush1.msra.mxu0 %v130
    %162 = vmatprep.subr.mxu0 0.0
    %163 = vmatpush1.msra.mxu0 %v131
    %164 = vmatprep.subr.mxu0 0.0
    %165 = vmatpush1.msra.mxu0 %v132
    %166 = vmatprep.subr.mxu0 0.0
    %167 = vmatpush1.msra.mxu0 %v133
    %168 = vmatprep.subr.mxu0 0.0
    %169 = vmatpush1.msra.mxu0 %v134
    %170 = vmatprep.subr.mxu0 0.0
    %171 = vmatpush1.msra.mxu0 %v135
    %172 = vmatprep.subr.mxu0 0.0
    %173 = vmatpush1.msra.mxu0 %v136
    %174 = vmatprep.subr.mxu0 0.0
    %175 = vmatpush1.msra.mxu0 %v137
    %176 = vmatprep.subr.mxu0 0.0
    %177 = vmatpush1.msra.mxu0 %v138
    %178 = vmatprep.subr.mxu0 0.0
    %179 = vmatpush1.msra.mxu0 %v139
    %180 = vmatprep.subr.mxu0 0.0
    %181 = vmatpush1.msra.mxu0 %v140
    %182 = vmatprep.subr.mxu0 0.0
    %183 = vmatpush1.msra.mxu0 %v141
    %184 = vmatprep.subr.mxu0 0.0
    %185 = vmatpush1.msra.mxu0 %v142
    %186 = vmatprep.subr.mxu0 0.0
    %187 = vmatpush1.msra.mxu0 %v143
    %188 = vmatprep.subr.mxu0 0.0
    %189 = vmatpush1.msra.mxu0 %v144
    %190 = vmatprep.subr.mxu0 0.0
    %191 = vmatpush1.msra.mxu0 %v145
    %192 = vmatprep.subr.mxu0 0.0
    %193 = vmatpush1.msra.mxu0 %v146
    %194 = vmatprep.subr.mxu0 0.0
    %195 = vmatpush1.msra.mxu0 %v147
    %196 = vmatprep.subr.mxu0 0.0
    %197 = vmatpush1.msra.mxu0 %v148
    %198 = vmatprep.subr.mxu0 0.0
    %199 = vmatpush1.msra.mxu0 %v149
    %200 = vmatprep.subr.mxu0 0.0
    %201 = vmatpush1.msra.mxu0 %v150
    %202 = vmatprep.subr.mxu0 0.0
    %203 = vmatpush1.msra.mxu0 %v151
    %204 = vmatprep.subr.mxu0 0.0
    %205 = vmatpush1.msra.mxu0 %v152
    %206 = vmatprep.subr.mxu0 0.0
    %207 = vmatpush1.msra.mxu0 %v153
    %208 = vmatprep.subr.mxu0 0.0
    %209 = vmatpush1.msra.mxu0 %v154
    %210 = vmatprep.subr.mxu0 0.0
    %211 = vmatpush1.msra.mxu0 %v155
    %212 = vmatprep.subr.mxu0 0.0
    %213 = vmatpush1.msra.mxu0 0.0
    %214 = vmatprep.subr.mxu0 0.0
    %215 = vmatpush1.msra.mxu0 0.0
    %216 = vmatprep.subr.mxu0 0.0
    %217 = vmatpush1.msra.mxu0 0.0
    %218 = vmatprep.subr.mxu0 0.0
    %219 = vmatpush1.msra.mxu0 0.0
    %220 = vmatprep.subr.mxu0 0.0
    %221 = vmatpush1.msra.mxu0 0.0
    %222 = vmatprep.subr.mxu0 0.0
    %223 = vmatpush1.msra.mxu0 0.0
    %224 = vmatprep.mubr.f32.mxu0 %v158
    %225 = vmatmul.mubr.f32.gmra.mrb[0].mxu0 %v128
    %v226 = vpop.f32.mrb[0].mxu0
    %v227 = vadd.f32 0.0, %v226
    %v228 = vpop.f32.mrb[0].mxu0
    %229 = vdwg.mxu0
    %230 = vst [vmem:[#allocation7] sm:$0x3] %v227
    // Predicated region
    $region18: #{tpu_custom_call.1} parent=1 // pred_check
      _
    $region19: #{tpu_custom_call.1} parent=1 // pred_check_branch
      %232 = sbr.rel (0) target = $region21
    $region20: #{tpu_custom_call.1} parent=1 // pred_region
      %s234 = ssub.s32 32, 32
      %235 = vsyncadd [#allocation4], %s234
      %s237 = sshll.u32 [#allocation7], 4
      %s238 = int_to_ptr.vmem [resolvable:$true] %s237
      %240 = dma.vmem_to_hbm [thread:$0]  %s238, 32, %s2, [#allocation4]
    $region21: #{tpu_custom_call.1} parent=1 // pred_fallthru
      _
    // Predicated region
    $region22: #{tpu_custom_call.1} parent=1 // pred_check
      _
    $region23: #{tpu_custom_call.1} parent=1 // pred_check_branch
      %242 = sbr.rel (0) target = $region25
    $region24: #{tpu_custom_call.1} parent=1 // pred_region
      %243 = dma.done [#allocation4], 32
    $region25: #{tpu_custom_call.1} parent=1 // pred_fallthru
      _
    %244 = vsyncpa [#allocation3], 1
    %245 = vsyncpa [#allocation6], 1
    %246 = vsyncpa [#allocation4], 1

</llo_original>
